<compile_context>
chip_gen: v6e
topology: v6e:2x2x1
jax: 0.10.0
libtpu: 0.0.40
codegen_flags: <defaults>
</compile_context>

<pallas_src>
import math
from functools import partial

import numpy as np
import jax
import jax.numpy as jnp
from jax.experimental import pallas as pl
from jax.experimental.pallas import tpu as pltpu


def _round_up(a, b):
    return (a + b - 1) // b * b


def _hadamard_matrix(n):
    """Dense +/-1 Sylvester-Hadamard matrix of size n (n is a power of 2)."""
    assert n & (n - 1) == 0 and n > 0
    h = np.array([[1.0]], dtype=np.float32)
    while h.shape[0] < n:
        h = np.block([[h, h], [h, -h]])
    return jnp.asarray(h, dtype=jnp.float32)


def _compose_bh4_matrix(weight, *, out_dim, decay):
    """Fold the whole BH4 linear chain into one (D, out_dim) matrix.

    M_r = blockdiag(W_r0)·H · blockdiag(W_r1)·H · blockdiag(W_r2)·H ·
          blockdiag(W_r3)·H                                  (D x D per repeat)
    M   = [decay * M_0 + (1-decay) * I, ..., decay * M_{R-1} + (1-decay) * I]
    and finally the output column slice [:out_dim] is folded in as well.
    This is a handful of 32x32 matmuls -- negligible wrapper work.
    """
    R, four, K, S, _ = weight.shape
    assert four == 4
    D = K * S
    hmat = _hadamard_matrix(D)
    eye = jnp.eye(D, dtype=jnp.float32)
    w = weight.astype(jnp.float32)
    cols = []
    for r in range(R):
        m = eye
        for f in range(4):
            bd = jnp.zeros((D, D), jnp.float32)
            for k in range(K):
                bd = bd.at[k * S:(k + 1) * S, k * S:(k + 1) * S].set(w[r, f, k])
            m = jnp.dot(m, bd, precision=jax.lax.Precision.HIGHEST)
            m = jnp.dot(m, hmat, precision=jax.lax.Precision.HIGHEST)
        cols.append(decay * m + (1.0 - decay) * eye)
    return jnp.concatenate(cols, axis=1)[:, :out_dim]        # (D, out_dim)


def _bh4_matmul_kernel(x_ref, m_ref, o_ref):
    # x_ref: (TN, D) token tile, m_ref: (D, out_dim) composed weight (resident),
    # o_ref: (TN, out_dim) final output tile.  Single MXU matmul, default
    # precision (the composed weight is built in f32 in the wrapper).
    o_ref[...] = jnp.dot(x_ref[...], m_ref[...],
                         preferred_element_type=jnp.float32)


@partial(jax.jit, static_argnames=("in_dim", "out_dim", "decay_coeff"))
def bh4_forward(x, weight, *, in_dim, out_dim, decay_coeff):
    """Pallas implementation of BH4.forward."""
    R, four, K, S, S2 = weight.shape
    assert four == 4 and S == S2
    D = K * S                      # padded_in_dim
    lead = x.shape[:-1]
    assert x.shape[-1] == in_dim
    N = int(np.prod(lead)) if lead else 1

    xs = x.reshape(N, in_dim).astype(jnp.float32)
    if in_dim < D:                 # zero-pad features up to padded_in_dim
        xs = jnp.pad(xs, ((0, 0), (0, D - in_dim)))

    # Token tiling: large tiles (mem-bound), but keep >= 2 parallel grid steps
    # when possible so both v7x TensorCores get work.
    N_pad = _round_up(max(N, 1), 8)
    if N_pad <= 8:
        TN = N_pad
    else:
        TN = min(1024, _round_up(pl.cdiv(N_pad, 2), 8))
    N_pad = _round_up(N_pad, TN)
    if N_pad > N:
        xs = jnp.pad(xs, ((0, N_pad - N), (0, 0)))

    # Fold block-diag weights, Hadamard, decay, residual and output slice into
    # one (D, out_dim) matrix -- the kernel then streams x once and writes the
    # final output once.
    m = _compose_bh4_matrix(weight, out_dim=out_dim, decay=float(decay_coeff))

    out = pl.pallas_call(
        _bh4_matmul_kernel,
        out_shape=jax.ShapeDtypeStruct((N_pad, out_dim), jnp.float32),
        grid_spec=pltpu.PrefetchScalarGridSpec(
            num_scalar_prefetch=0,
            grid=(N_pad // TN,),
            in_specs=[
                pl.BlockSpec((TN, D), lambda n: (n, 0)),
                pl.BlockSpec((D, out_dim), lambda n: (0, 0)),   # resident
            ],
            out_specs=pl.BlockSpec((TN, out_dim), lambda n: (n, 0)),
        ),
        compiler_params=pltpu.CompilerParams(
            dimension_semantics=("parallel",)),
    )(xs, m)

    out = out[:N]
    return out.reshape(*lead, out_dim).astype(x.dtype)


def bh4_reference(x, weight, *, in_dim, out_dim, decay_coeff):
    """Pure-JAX reference of the factorized math (for correctness check)."""
    R, _, K, S, _ = weight.shape
    D = K * S
    lead = x.shape[:-1]
    N = int(np.prod(lead)) if lead else 1
    xs = x.reshape(N, in_dim).astype(jnp.float32)
    if in_dim < D:
        xs = jnp.pad(xs, ((0, 0), (0, D - in_dim)))
    hmat = _hadamard_matrix(D)
    h = jnp.broadcast_to(xs[:, None, :], (N, R, D)).reshape(N, R, K, S)
    for f in range(4):
        h = jnp.einsum('nrks,rkst->nrkt', h, weight[:, f],
                       precision=jax.lax.Precision.HIGHEST)
        h = h.reshape(N, R, D)
        h = jnp.einsum('nrd,de->nre', h, hmat,
                       precision=jax.lax.Precision.HIGHEST)
        h = h.reshape(N, R, K, S)
    h = h.reshape(N, R * D)
    out = decay_coeff * h + (1.0 - decay_coeff) * jnp.tile(xs, (1, R))
    out = out[:, :out_dim]
    return out.reshape(*lead, out_dim)


if __name__ == "__main__":
    # BH4(in_dim=30, out_dim=48, block_size=8):
    #   padded_in_dim = 32, num_repeat = 2, num_block = 4
    in_dim, out_dim, block_size, decay_coeff = 30, 48, 8, 0.7
    padded_in_dim = int(2 ** math.ceil(math.log2(in_dim)))
    num_repeat = max(1, int(math.ceil(out_dim / padded_in_dim)))
    num_block = padded_in_dim // block_size
    coeff = math.sqrt(block_size * padded_in_dim)

    key = jax.random.PRNGKey(0)
    kx, kw = jax.random.split(key)
    x = jax.random.normal(kx, (2, 8, in_dim), dtype=jnp.float32)
    weight = jax.random.normal(
        kw, (num_repeat, 4, num_block, block_size, block_size),
        dtype=jnp.float32) / coeff

    out = bh4_forward(x, weight, in_dim=in_dim, out_dim=out_dim,
                      decay_coeff=decay_coeff)
    out = jax.block_until_ready(out)
    assert out.shape == (2, 8, out_dim), out.shape

    ref = bh4_reference(x, weight, in_dim=in_dim, out_dim=out_dim,
                        decay_coeff=decay_coeff)
    np.testing.assert_allclose(np.asarray(out), np.asarray(ref),
                               rtol=2e-2, atol=2e-2)
    print("KERNEL_OK")
</pallas_src>

<mosaic_0001>
module attributes {stable_mosaic.version = 11 : i64} {
  func.func @_bh4_matmul_kernel(%arg0: i32, %arg1: memref<8x32xf32, #tpu.memory_space<vmem>>, %arg2: memref<32x48xf32, #tpu.memory_space<vmem>>, %arg3: memref<8x48xf32, #tpu.memory_space<vmem>>) attributes {dimension_semantics = [#tpu.dimension_semantics<parallel>], iteration_bounds = array<i64: 2>, scalar_prefetch = 0 : i64, scratch_operands = 0 : i64, tpu.core_type = #tpu.core_type<tc>, window_params = [{transform_indices = @transform_0, window_bounds = array<i64: 8, 32>}, {pipeline_mode = #tpu.pipeline_mode<synchronous>, transform_indices = @transform_1, window_bounds = array<i64: 32, 48>}, {transform_indices = @transform_2, window_bounds = array<i64: 8, 48>}]} {
    %c0 = arith.constant 0 : index
    %c0_0 = arith.constant 0 : index
    %0 = vector.load %arg1[%c0, %c0_0] : memref<8x32xf32, #tpu.memory_space<vmem>>, vector<8x32xf32>
    %c0_1 = arith.constant 0 : index
    %c0_2 = arith.constant 0 : index
    %1 = vector.load %arg2[%c0_1, %c0_2] : memref<32x48xf32, #tpu.memory_space<vmem>>, vector<32x48xf32>
    %cst = arith.constant dense<0.000000e+00> : vector<8x48xf32>
    %2 = tpu.matmul %0, %1, %cst {dimension_numbers = #tpu.dot_dimension_numbers<[1], [0], [0], [1], [0, 0, 1, 1], [], []>} : vector<8x32xf32>, vector<32x48xf32>, vector<8x48xf32> -> vector<8x48xf32>
    %c0_3 = arith.constant 0 : index
    %c0_4 = arith.constant 0 : index
    %3 = vector.load %arg3[%c0_3, %c0_4] : memref<8x48xf32, #tpu.memory_space<vmem>>, vector<8x48xf32>
    tpu.vector_store %arg3[%c0_3, %c0_4], %2 {strides = array<i32>} : memref<8x48xf32, #tpu.memory_space<vmem>>, vector<8x48xf32>,
    return
  }
  func.func @transform_0(%arg0: i32) -> (i32, i32) {
    %c0_i32 = arith.constant 0 : i32
    %c0_i32_0 = arith.constant 0 : i32
    return %arg0, %c0_i32 : i32, i32
  }
  func.func @transform_1(%arg0: i32) -> (i32, i32) {
    %c0_i32 = arith.constant 0 : i32
    %c0_i32_0 = arith.constant 0 : i32
    %c0_i32_1 = arith.constant 0 : i32
    return %c0_i32, %c0_i32_0 : i32, i32
  }
  func.func @transform_2(%arg0: i32) -> (i32, i32) {
    %c0_i32 = arith.constant 0 : i32
    %c0_i32_0 = arith.constant 0 : i32
    return %arg0, %c0_i32 : i32, i32
  }
}

</mosaic_0001>

<llo_original>
// kernel: bh4_forward.1
$region0: #{bh4_forward.1}
  #allocation0 [shape = 'u32[]', space=smem, size = 0x4, offset = 0x4, fixed_abs, tag = 'smem constant byte address 0x4 - core index']
  #allocation1 [shape = 'u32[144,128]{1,0:T(1,128)}', space=vmem, size = 0x12000, scoped, tag = 'internal scratch']
  %s0 = inlined_call_operand.vmem [shape: f32[16,32], index: 0, kind: input, shape index: {}]
  %s1 = inlined_call_operand.vmem [shape: f32[32,48], index: 1, kind: input, shape index: {}]
  %s2 = inlined_call_operand.hbm [shape: f32[16,48], index: 2, kind: output, shape index: {}]
  %s3 = sld [smem:[#allocation0]]
  $region41: #{bh4_forward.1} parent=0
    _
  %s5 = ssub.s32 1, %s3
  %s6 = scalar_select 0, %s5, %s3
  $region1: #{bh4_forward.1} parent=0
    #allocation2 [shape = 'u8[8192]{0}', space=vmem, size = 0x2000, scoped, tag = 'output window, operand 0']
    #allocation3 [shape = 's32[2]{0}', space=sflag, size = 0x8, scoped, tag = 'scoped memory for bh4_forward.1']
    %7 = vsyncpa [#allocation3], 0
    %s8 = scalar_lea.sflag [#allocation3], 1
    %9 = vsyncpa %s8, 0
    loop: start=0, step=1, limit=4
    $region2: #{bh4_forward.1} parent=1 // loop_pre_header
      _
    $region3: #{bh4_forward.1} parent=1 // loop_header
      %s11 = sphi 0, %s15
      %p12 = scmp.ge.s32.totalorder %s11, 4
      %s21 = sphi 0, %s23
      %s24 = sphi 0, %s21
      %s25 = sphi 0, %s24
      %s41 = sphi 0, %s25
      %s45 = sphi 0, %s45
      %s47 = sphi 0, %s45
      %s48 = sphi 0, %s47
      %s62 = sphi 0, %s48
      %s68 = sphi 0, %s70
      %s71 = sphi 0, %s68
      %s72 = sphi 0, %s71
      %s88 = sphi 0, %s72
    $region4: #{bh4_forward.1} parent=1 // loop_header_branch
      %14 = sbr.rel (%p12) target = $region8
    $region5: #{bh4_forward.1} parent=1 // loop_body
      %s16 = ssub.s32 %s11, 1
      %s17 = ssub.s32 %s11, 2
      %s18 = sadd.s32 %s11, 1
      %s19 = ssub.s32 %s11, %s18
      %p20 = scmp.eq.s32.totalorder %s19, 0
      %s22 = sadd.s32 %s21, 1
      %s23 = scalar_select %p20, %s21, %s22
      %p26 = pneg %p20
      %p27 = scmp.eq.s32.totalorder %s11, 1
      %p28 = por %p26, %p27
      %p29 = scmp.ne.s32.totalorder %s21, %s24
      %p30 = scmp.eq.s32.totalorder %s11, 0
      %p31 = por %p29, %p30
      %p32 = scmp.ne.s32.totalorder %s21, %s24
      %p33 = scmp.eq.s32.totalorder %s16, 1
      %p34 = por %p32, %p33
      %p35 = scmp.ne.s32.totalorder %s24, %s25
      %p36 = scmp.eq.s32.totalorder %s16, 0
      %p37 = por %p35, %p36
      %p38 = scmp.ne.s32.totalorder %s24, %s25
      %p39 = scmp.eq.s32.totalorder %s17, 1
      %p40 = por %p38, %p39
      %p42 = scmp.ne.s32.totalorder %s25, %s41
      %p43 = scmp.eq.s32.totalorder %s17, 0
      %p44 = por %p42, %p43
      %s46 = sadd.s32 %s45, 1
      %p49 = scmp.eq.s32.totalorder %s11, 1
      %p50 = scmp.ne.s32.totalorder %s45, %s47
      %p51 = scmp.eq.s32.totalorder %s11, 0
      %p52 = por %p50, %p51
      %p53 = scmp.ne.s32.totalorder %s45, %s47
      %p54 = scmp.eq.s32.totalorder %s16, 1
      %p55 = por %p53, %p54
      %p56 = scmp.ne.s32.totalorder %s47, %s48
      %p57 = scmp.eq.s32.totalorder %s16, 0
      %p58 = por %p56, %p57
      %p59 = scmp.ne.s32.totalorder %s47, %s48
      %p60 = scmp.eq.s32.totalorder %s17, 1
      %p61 = por %p59, %p60
      %p63 = scmp.ne.s32.totalorder %s48, %s62
      %p64 = scmp.eq.s32.totalorder %s17, 0
      %p65 = por %p63, %p64
      %s66 = ssub.s32 %s11, %s18
      %p67 = scmp.eq.s32.totalorder %s66, 0
      %s69 = sadd.s32 %s68, 1
      %s70 = scalar_select %p67, %s68, %s69
      %p73 = pneg %p67
      %p74 = scmp.eq.s32.totalorder %s11, 1
      %p75 = por %p73, %p74
      %p76 = scmp.ne.s32.totalorder %s68, %s71
      %p77 = scmp.eq.s32.totalorder %s11, 0
      %p78 = por %p76, %p77
      %p79 = scmp.ne.s32.totalorder %s68, %s71
      %p80 = scmp.eq.s32.totalorder %s16, 1
      %p81 = por %p79, %p80
      %p82 = scmp.ne.s32.totalorder %s71, %s72
      %p83 = scmp.eq.s32.totalorder %s16, 0
      %p84 = por %p82, %p83
      %p85 = scmp.ne.s32.totalorder %s71, %s72
      %p86 = scmp.eq.s32.totalorder %s17, 1
      %p87 = por %p85, %p86
      %p89 = scmp.ne.s32.totalorder %s72, %s88
      %p90 = scmp.eq.s32.totalorder %s17, 0
      %p91 = por %p89, %p90
      %p92 = scmp.le.s32.totalorder 1, %s11
      %p93 = scmp.lt.s32.totalorder %s11, 3
      %p94 = pnand %p92, %p93
      %p95 = pneg %p94
      // Predicated region
      $region9: #{bh4_forward.1} parent=5 // pred_check
        _
      $region10: #{bh4_forward.1} parent=5 // pred_check_branch
        %97 = sbr.rel (%p94) target = $region12
      $region11: #{bh4_forward.1} parent=5 // pred_region
        %s98 = ssub.s32 %s11, 1
        // Predicated region
        $region13: #{bh4_forward.1} parent=11 // pred_check
          %p99 = pneg %p58
        $region14: #{bh4_forward.1} parent=11 // pred_check_branch
          %101 = sbr.rel (%p99) target = $region16
        $region15: #{bh4_forward.1} parent=11 // pred_region
          _
        $region16: #{bh4_forward.1} parent=11 // pred_fallthru
          _
      $region12: #{bh4_forward.1} parent=5 // pred_fallthru
        _
      %p102 = scmp.lt.s32.totalorder %s11, 2
      // Predicated region
      $region17: #{bh4_forward.1} parent=5 // pred_check
        %p103 = pneg %p102
      $region18: #{bh4_forward.1} parent=5 // pred_check_branch
        %105 = sbr.rel (%p103) target = $region20
      $region19: #{bh4_forward.1} parent=5 // pred_region
        // Predicated region
        $region21: #{bh4_forward.1} parent=19 // pred_check
          %p106 = pneg %p31
        $region22: #{bh4_forward.1} parent=19 // pred_check_branch
          %108 = sbr.rel (%p106) target = $region24
        $region23: #{bh4_forward.1} parent=19 // pred_region
          %p109 = scmp.lt.s32.totalorder %s11, 1
          %s110 = scalar_select %p109, %s11, 1
          %s111 = smul.addr %s110, 8
          %s112 = scalar_lea.vmem %s0, %s111
        $region24: #{bh4_forward.1} parent=19 // pred_fallthru
          _
      $region20: #{bh4_forward.1} parent=5 // pred_fallthru
        _
      %p113 = scmp.le.s32.totalorder 1, %s11
      %p114 = scmp.lt.s32.totalorder %s11, 3
      %p115 = pnand %p113, %p114
      %p116 = pneg %p115
      // Predicated region
      $region25: #{bh4_forward.1} parent=5 // pred_check
        _
      $region26: #{bh4_forward.1} parent=5 // pred_check_branch
        %118 = sbr.rel (%p115) target = $region28
      $region27: #{bh4_forward.1} parent=5 // pred_region
        %s119 = ssub.s32 %s11, 1
        %p120 = scmp.lt.s32.totalorder %s16, 1
        %s121 = scalar_select %p120, %s16, 1
        %s122 = smul.addr %s121, 8
        %s123 = scalar_lea.vmem %s0, %s122
        %p124 = pneg %p37
        %p125 = pneg %p34
        %p126 = pneg %p58
        %p127 = pneg %p55
        %p128 = pneg %p84
        %p129 = pneg %p81
        %s130 = sand.u32 %s71, 1
        %s131 = scalar_lea.sflag [#allocation3], %s130
        %s132 = sand.u32 %s71, 1
        %s133 = smul.addr %s132, 8
        %s134 = scalar_lea.vmem [#allocation2], %s133
        %p135 = scmp.lt.s32.totalorder %s16, 1
        %s136 = scalar_select %p135, %s16, 1
        %s137 = smul.addr %s136, 8
        %s138 = scalar_lea.vmem %s0, %s137
        %v139 = vld [vmem:[%s138] sm:$0xff]
        %v140 = vld [vmem:[%s1] sm:$0xff]
        %v141 = vld [vmem:[%s1 + $0x8] sm:$0xff]
        %v142 = vld [vmem:[%s1 + $0x10] sm:$0xff]
        %v143 = vld [vmem:[%s1 + $0x18] sm:$0xff]
        %vm144 = vcmask 261120
        %v146 = vsel %vm144, %v139, 0
        %148 = vmatprep.subr.mxu0 0.0
        %149 = vmatpush1.msra.mxu0 0.0
        %150 = vmatprep.subr.mxu0 0.0
        %151 = vmatpush1.msra.mxu0 0.0
        %152 = vmatprep.subr.mxu0 0.0
        %153 = vmatpush1.msra.mxu0 0.0
        %154 = vmatprep.subr.mxu0 0.0
        %155 = vmatpush1.msra.mxu0 0.0
        %156 = vmatprep.subr.mxu0 0.0
        %157 = vmatpush1.msra.mxu0 0.0
        %158 = vmatprep.subr.mxu0 0.0
        %159 = vmatpush1.msra.mxu0 0.0
        %160 = vmatprep.subr.mxu0 0.0
        %161 = vmatpush1.msra.mxu0 0.0
        %162 = vmatprep.subr.mxu0 0.0
        %163 = vmatpush1.msra.mxu0 0.0
        %164 = vmatprep.subr.mxu0 0.0
        %165 = vmatpush1.msra.mxu0 0.0
        %166 = vmatprep.subr.mxu0 0.0
        %167 = vmatpush1.msra.mxu0 0.0
        %168 = vmatprep.subr.mxu0 0.0
        %169 = vmatpush1.msra.mxu0 0.0
        %170 = vmatprep.subr.mxu0 0.0
        %171 = vmatpush1.msra.mxu0 0.0
        %172 = vmatprep.subr.mxu0 0.0
        %173 = vmatpush1.msra.mxu0 %v143
        %174 = vmatprep.subr.mxu0 0.0
        %175 = vmatpush1.msra.mxu0 %v142
        %176 = vmatprep.subr.mxu0 0.0
        %177 = vmatpush1.msra.mxu0 %v141
        %178 = vmatprep.subr.mxu0 0.0
        %179 = vmatpush1.msra.mxu0 %v140
        %180 = vmatprep.subr.mxu0 0.0
        %181 = vmatpush2.msra.mxu0 0.0
        %182 = vmatprep.subr.mxu0 0.0
        %183 = vmatpush2.msra.mxu0 0.0
        %184 = vmatprep.subr.mxu0 0.0
        %185 = vmatpush2.msra.mxu0 0.0
        %186 = vmatprep.subr.mxu0 0.0
        %187 = vmatpush2.msra.mxu0 0.0
        %188 = vmatprep.subr.mxu0 0.0
        %189 = vmatpush2.msra.mxu0 0.0
        %190 = vmatprep.subr.mxu0 0.0
        %191 = vmatpush2.msra.mxu0 0.0
        %192 = vmatprep.subr.mxu0 0.0
        %193 = vmatpush2.msra.mxu0 0.0
        %194 = vmatprep.subr.mxu0 0.0
        %195 = vmatpush2.msra.mxu0 0.0
        %196 = vmatprep.subr.mxu0 0.0
        %197 = vmatpush2.msra.mxu0 0.0
        %198 = vmatprep.subr.mxu0 0.0
        %199 = vmatpush2.msra.mxu0 0.0
        %200 = vmatprep.subr.mxu0 0.0
        %201 = vmatpush2.msra.mxu0 0.0
        %202 = vmatprep.subr.mxu0 0.0
        %203 = vmatpush2.msra.mxu0 0.0
        %204 = vmatprep.subr.mxu0 0.0
        %205 = vmatpush2.msra.mxu0 0.0
        %206 = vmatprep.subr.mxu0 0.0
        %207 = vmatpush2.msra.mxu0 0.0
        %208 = vmatprep.subr.mxu0 0.0
        %209 = vmatpush2.msra.mxu0 0.0
        %210 = vmatprep.subr.mxu0 0.0
        %211 = vmatpush2.msra.mxu0 0.0
        %212 = vmatprep.mubr.f32.mxu0 0.0
        %213 = vmatmul.mubr.f32.gmra.mxu0 %v146
        %v214 = vpop.f32.mrf.mxu0
        %v215 = vadd.f32 0.0, %v214
        %v216 = vpop.f32.mrf.mxu0
        %217 = vdwg.mxu0
        %vm218 = vcmask 392192
        %219 = vst.msk [vmem:[%s134] sm:$0xff] %vm218, %v215
        %s220 = sand.u32 %s71, 1
        %s221 = scalar_lea.sflag [#allocation3], %s220
        %s222 = sand.u32 %s71, 1
        %s223 = smul.addr %s222, 8
        %s224 = scalar_lea.vmem [#allocation2], %s223
        // Predicated region
        $region29: #{bh4_forward.1} parent=27 // pred_check
          %p225 = pneg %p81
        $region30: #{bh4_forward.1} parent=27 // pred_check_branch
          %227 = sbr.rel (%p225) target = $region32
        $region31: #{bh4_forward.1} parent=27 // pred_region
          %s229 = ssub.s32 128, 128
          %230 = vsyncadd %s221, %s229
          %s231 = smul.addr %s16, 128
          %s232 = scalar_lea.hbm %s2, %s231
          %s234 = sshll.u32 %s224, 4
          %s235 = int_to_ptr.vmem [resolvable:$true] %s234
          %237 = dma.vmem_to_hbm [thread:$0]  %s235, 128, %s232, %s221
        $region32: #{bh4_forward.1} parent=27 // pred_fallthru
          _
      $region28: #{bh4_forward.1} parent=5 // pred_fallthru
        _
      %p238 = scmp.le.s32.totalorder 2, %s11
      // Predicated region
      $region33: #{bh4_forward.1} parent=5 // pred_check
        %p239 = pneg %p238
      $region34: #{bh4_forward.1} parent=5 // pred_check_branch
        %241 = sbr.rel (%p239) target = $region36
      $region35: #{bh4_forward.1} parent=5 // pred_region
        %s242 = ssub.s32 %s11, 2
        // Predicated region
        $region37: #{bh4_forward.1} parent=35 // pred_check
          %p243 = pneg %p87
        $region38: #{bh4_forward.1} parent=35 // pred_check_branch
          %245 = sbr.rel (%p243) target = $region40
        $region39: #{bh4_forward.1} parent=35 // pred_region
          %s246 = sand.u32 %s72, 1
          %s247 = scalar_lea.sflag [#allocation3], %s246
          %s248 = sand.u32 %s72, 1
          %s249 = smul.addr %s248, 8
          %s250 = scalar_lea.vmem [#allocation2], %s249
          %251 = dma.done %s247, 128
        $region40: #{bh4_forward.1} parent=35 // pred_fallthru
          _
      $region36: #{bh4_forward.1} parent=5 // pred_fallthru
        _
    $region6: #{bh4_forward.1} parent=1 // loop_footer
      %s15 = sadd.s32 1, %s11
    $region7: #{bh4_forward.1} parent=1 // loop_footer_branch
      %10 = sbr.rel target = $region3
    $region8: #{bh4_forward.1} parent=1 // loop_exit
      _
    %252 = vsyncpa [#allocation3], 1
    %s253 = scalar_lea.sflag [#allocation3], 1
    %254 = vsyncpa %s253, 1

</llo_original>
